<compile_context>
chip_gen: v5e
topology: v5e:2x2
jax: 0.10.0
libtpu: 0.0.40
codegen_flags: <defaults>
</compile_context>

<pallas_src>
import functools

import jax
import jax.numpy as jnp
import numpy as np
from jax import lax
from jax.experimental import pallas as pl
from jax.experimental.pallas import tpu as pltpu


def positional_encoding(d_model: int, seq_len: int) -> jnp.ndarray:
    """JAX replica of the PyTorch positional_encoding helper -> (1, seq_len, d_model)."""
    enc = np.zeros((seq_len, d_model), dtype=np.float32)
    pos = np.arange(0, seq_len, dtype=np.float32)[:, None]
    _2i = np.arange(0, d_model, 2, dtype=np.float32)
    div = 10000.0 ** (_2i / d_model)
    enc[:, 0::2] = np.sin(pos / div)
    enc[:, 1::2] = np.cos(pos / div)
    return jnp.asarray(enc[None])


def _round_up(x: int, m: int) -> int:
    return ((x + m - 1) // m) * m


def _vmem_capacity_bytes() -> int:
    """Physical VMEM of the local chip; conservative 64 MiB (v7x) fallback."""
    try:
        return int(pltpu.get_tpu_info().vmem_capacity_bytes)
    except Exception:
        return 64 * 1024 * 1024


def _make_embed_kernel(tb: int):
    """Kernel for one (seq-tile, batch-tile) grid step.

    patches_ref: (TB, TS, K) bf16 -- flattened patches; row 0 of each image
                                     (seq tile 0) is the all-zero cls row.
    w_ref:       (Dp, K)     bf16 -- conv weight flattened, NOT transposed.
    posb_ref:    (TS, Dp)    f32  -- fused table: row0 = cls_token + pos[0],
                                     rows 1.. = pos[1+i] + conv_bias.
    out_ref:     (TB, TS, Dp) f32
    """
    def kernel(patches_ref, w_ref, posb_ref, out_ref):
        w = w_ref[...]
        posb = posb_ref[...]
        # Static unroll over the TB images of this block: TB MXU matmuls with a
        # transposed RHS, f32 accumulation, one VPU add, lane-dense store.
        for i in range(tb):
            proj = lax.dot_general(
                patches_ref[i], w,
                dimension_numbers=(((1,), (1,)), ((), ())),
                preferred_element_type=jnp.float32,
            )
            out_ref[i] = proj + posb
    return kernel


@functools.partial(jax.jit, static_argnames=("patch_size",))
def vit_embeddings(pixel_values, proj_weight, proj_bias, cls_token, pos_emb,
                   *, patch_size: int):
    """ViTEmbeddings.forward.

    pixel_values: (B, C, H, W) NCHW, as in PyTorch.
    proj_weight:  (D, C, P, P) PyTorch Conv2d layout (stride == kernel_size).
    proj_bias:    (D,); cls_token: (1, 1, D); pos_emb: (1, N+1, D).
    Returns (B, N+1, D) float32 -- same layout/semantics as the module.
    """
    B, C, H, W = pixel_values.shape
    P = patch_size
    nh, nw = H // P, W // P
    N = nh * nw
    D = proj_weight.shape[0]
    K = C * P * P
    S = N + 1                                      # seq length incl. cls row

    # Lane-dense output: pad hidden dim to a multiple of 128 (no-op for real D).
    Dp = _round_up(D, 128)

    # --- Patchify (Conv2d with stride == kernel_size == per-patch matmul).
    # Cast to bf16 FIRST so the materialized patch slab is bf16; under jit the
    # cast/reshape/transpose/pad below fuse into one XLA fusion.
    patches = (pixel_values.astype(jnp.bfloat16)
               .reshape(B, C, nh, P, nw, P)
               .transpose(0, 2, 4, 1, 3, 5)
               .reshape(B, N, K))

    # --- Fused position / bias / cls table (tiny, f32).
    pos = pos_emb.reshape(S, D).astype(jnp.float32)
    bias = proj_bias.reshape(1, D).astype(jnp.float32)
    cls = cls_token.reshape(1, D).astype(jnp.float32)
    posb = jnp.concatenate([cls + pos[0:1],        # zero patch row -> cls + pos[0]
                            pos[1:] + bias], axis=0)            # (S, D)

    # --- Weight, flattened, bf16, never transposed (MXU consumes it as RHS^T).
    w_dk = proj_weight.reshape(D, K).astype(jnp.bfloat16)        # (D, K)
    if Dp != D:
        w_dk = jnp.pad(w_dk, ((0, Dp - D), (0, 0)))
        posb = jnp.pad(posb, ((0, 0), (0, Dp - D)))

    # --- Tile sizing from the chip's VMEM (v5e/v6e: 128 MiB, v7x: 64 MiB).
    vmem_budget = int(0.70 * _vmem_capacity_bytes())

    def step_bytes(tb_, ts_):
        return (2 * tb_ * ts_ * (K * 2 + Dp * 4)   # double-buffered patch in + f32 out
                + Dp * K * 2                       # weight (single-buffered)
                + 2 * ts_ * Dp * 4)                # posb

    if step_bytes(1, S) <= vmem_budget:
        # Common case (all real ViT configs): full sequence in one block — no
        # seq padding, so the kernel's output slab *is* the module output.
        TS, n_seq, S_pad = S, 1, S
    else:
        # Rare huge-S fallback: tile the sequence (multiple of 16 for bf16
        # sublane packing), pad the tail, slice it off afterwards.
        TS = max(16, (min(512, S) // 16) * 16)
        n_seq = pl.cdiv(S, TS)
        S_pad = n_seq * TS

    # Batch blocking: largest divisor of B (<= 8) that fits the VMEM budget.
    tb = 1
    for cand in range(1, min(B, 8) + 1):
        if B % cand == 0 and step_bytes(cand, TS) <= vmem_budget:
            tb = cand
    n_b = B // tb

    # Prepend the all-zero cls patch row (+ optional seq-tail padding) in one
    # pad that fuses with the patchify transpose above.
    patches = jnp.pad(patches, ((0, 0), (1, S_pad - 1 - N), (0, 0)))
    if S_pad != S:
        posb = jnp.pad(posb, ((0, S_pad - S), (0, 0)))

    vmem_limit = int(min(max(2 * step_bytes(tb, TS), 16 * 1024 * 1024), vmem_budget))

    out = pl.pallas_call(
        _make_embed_kernel(tb),
        out_shape=jax.ShapeDtypeStruct((B, S_pad, Dp), jnp.float32),
        grid_spec=pl.GridSpec(
            # Seq tiles outer, batch inner: posb's block index is constant over
            # the whole batch sweep, so it is DMA'd only n_seq times.
            grid=(n_seq, n_b),
            in_specs=[
                pl.BlockSpec((tb, TS, K), lambda s, b: (b, s, 0)),      # patches
                pl.BlockSpec((Dp, K), lambda s, b: (0, 0),              # weight:
                             pipeline_mode=pl.Buffered(1)),             # grid-invariant
                pl.BlockSpec((TS, Dp), lambda s, b: (s, 0)),            # pos+bias(+cls)
            ],
            out_specs=pl.BlockSpec((tb, TS, Dp), lambda s, b: (b, s, 0)),
        ),
        compiler_params=pltpu.CompilerParams(
            dimension_semantics=("parallel", "parallel"),
            vmem_limit_bytes=vmem_limit),
    )(patches, w_dk, posb)

    # TODO(synk): fuse patch extraction into the kernel (grid over (TB, patch
    # row) with a (tb, C, P, W) pixel BlockSpec) to drop the intermediate patch
    # slab's HBM round trip entirely — the biggest remaining HBM lever.
    # TODO(synk): emit bf16 output if the downstream transformer consumes bf16
    # (halves the largest writeback stream); f32 kept to match the module.

    # For real configs (D % 128 == 0, S fits one block) this is a no-op.
    if S_pad != S or Dp != D:
        out = out[:, :S, :D]
    return out


def _reference(pixel_values, proj_weight, proj_bias, cls_token, pos_emb, patch_size):
    """Plain-JAX reference mirroring the PyTorch forward (same bf16 MXU inputs)."""
    B, C, H, W = pixel_values.shape
    P = patch_size
    nh, nw = H // P, W // P
    N = nh * nw
    D = proj_weight.shape[0]
    patches = (pixel_values.astype(jnp.bfloat16)
               .reshape(B, C, nh, P, nw, P)
               .transpose(0, 2, 4, 1, 3, 5)
               .reshape(B, N, C * P * P))
    w = proj_weight.reshape(D, -1).astype(jnp.bfloat16)
    proj = jnp.einsum("bnk,dk->bnd", patches, w,
                      preferred_element_type=jnp.float32)
    proj = proj + proj_bias.astype(jnp.float32)[None, None, :]
    cls = jnp.broadcast_to(cls_token.reshape(1, 1, D).astype(jnp.float32), (B, 1, D))
    emb = jnp.concatenate([cls, proj], axis=1)
    return emb + pos_emb.astype(jnp.float32)


if __name__ == "__main__":
    # Small config consistent with ViTEmbeddings(input_chans=4, hidden_dim=32,
    # patch_size=8, image_size=16) -> num_patches = 4, seq = 5.
    B, C, H = 2, 4, 16
    P, D = 8, 32
    N = (H // P) ** 2

    key = jax.random.PRNGKey(0)
    k_pix, k_w, k_b, k_cls = jax.random.split(key, 4)
    pixel_values = jax.random.normal(k_pix, (B, C, H, H), dtype=jnp.float32)

    # 1) The module's deterministic init: weight = 1, bias = 0, cls = 1, pos = sin/cos.
    proj_weight = jnp.ones((D, C, P, P), dtype=jnp.float32)
    proj_bias = jnp.zeros((D,), dtype=jnp.float32)
    cls_token = jnp.ones((1, 1, D), dtype=jnp.float32)
    pos_emb = positional_encoding(D, N + 1)                      # (1, N+1, D)

    out = vit_embeddings(pixel_values, proj_weight, proj_bias, cls_token, pos_emb,
                         patch_size=P)
    out = jax.block_until_ready(out)
    ref = _reference(pixel_values, proj_weight, proj_bias, cls_token, pos_emb, P)
    assert out.shape == (B, N + 1, D), out.shape
    np.testing.assert_allclose(np.asarray(out), np.asarray(ref), rtol=1e-2, atol=1e-2)

    # 2) Random parameters (exercises the bias-folding and cls-row fusion paths).
    proj_weight2 = 0.05 * jax.random.normal(k_w, (D, C, P, P), dtype=jnp.float32)
    proj_bias2 = jax.random.normal(k_b, (D,), dtype=jnp.float32)
    cls_token2 = jax.random.normal(k_cls, (1, 1, D), dtype=jnp.float32)
    out2 = jax.block_until_ready(
        vit_embeddings(pixel_values, proj_weight2, proj_bias2, cls_token2, pos_emb,
                       patch_size=P))
    ref2 = _reference(pixel_values, proj_weight2, proj_bias2, cls_token2, pos_emb, P)
    np.testing.assert_allclose(np.asarray(out2), np.asarray(ref2), rtol=1e-2, atol=1e-2)

    print("KERNEL_OK")
</pallas_src>

<mosaic_0001>
module attributes {stable_mosaic.version = 11 : i64} {
  func.func @kernel(%arg0: i32, %arg1: i32, %arg2: memref<2x5x256xbf16, #tpu.memory_space<vmem>>, %arg3: memref<128x256xbf16, #tpu.memory_space<vmem>>, %arg4: memref<5x128xf32, #tpu.memory_space<vmem>>, %arg5: memref<2x5x128xf32, #tpu.memory_space<vmem>>) attributes {dimension_semantics = [#tpu.dimension_semantics<parallel>, #tpu.dimension_semantics<parallel>], iteration_bounds = array<i64: 1, 1>, scalar_prefetch = 0 : i64, scratch_operands = 0 : i64, tpu.core_type = #tpu.core_type<tc>, window_params = [{transform_indices = @transform_0, window_bounds = array<i64: 2, 5, 256>}, {pipeline_mode = #tpu.pipeline_mode<synchronous>, transform_indices = @transform_1, window_bounds = array<i64: 128, 256>}, {transform_indices = @transform_2, window_bounds = array<i64: 5, 128>}, {transform_indices = @transform_3, window_bounds = array<i64: 2, 5, 128>}]} {
    %c0 = arith.constant 0 : index
    %c0_0 = arith.constant 0 : index
    %0 = vector.load %arg3[%c0, %c0_0] : memref<128x256xbf16, #tpu.memory_space<vmem>>, vector<128x256xbf16>
    %c0_1 = arith.constant 0 : index
    %c0_2 = arith.constant 0 : index
    %1 = vector.load %arg4[%c0_1, %c0_2] : memref<5x128xf32, #tpu.memory_space<vmem>>, vector<5x128xf32>
    %c0_3 = arith.constant 0 : index
    %c0_4 = arith.constant 0 : index
    %c0_5 = arith.constant 0 : index
    %2 = vector.load %arg2[%c0_3, %c0_4, %c0_5] : memref<2x5x256xbf16, #tpu.memory_space<vmem>>, vector<1x5x256xbf16>
    %3 = vector.shape_cast %2 : vector<1x5x256xbf16> to vector<5x256xbf16>
    %cst = arith.constant dense<0.000000e+00> : vector<5x128xf32>
    %4 = tpu.matmul %3, %0, %cst {dimension_numbers = #tpu.dot_dimension_numbers<[1], [1], [0], [0], [0, 0, 1, 0], [], []>} : vector<5x256xbf16>, vector<128x256xbf16>, vector<5x128xf32> -> vector<5x128xf32>
    %5 = arith.addf %4, %1 : vector<5x128xf32>
    %c0_6 = arith.constant 0 : index
    %c0_7 = arith.constant 0 : index
    %c0_8 = arith.constant 0 : index
    %6 = vector.load %arg5[%c0_6, %c0_7, %c0_8] : memref<2x5x128xf32, #tpu.memory_space<vmem>>, vector<1x5x128xf32>
    %7 = vector.shape_cast %6 : vector<1x5x128xf32> to vector<5x128xf32>
    %8 = vector.shape_cast %5 : vector<5x128xf32> to vector<1x5x128xf32>
    tpu.vector_store %arg5[%c0_6, %c0_7, %c0_8], %8 {strides = array<i32>} : memref<2x5x128xf32, #tpu.memory_space<vmem>>, vector<1x5x128xf32>,
    %c1 = arith.constant 1 : index
    %c0_9 = arith.constant 0 : index
    %c0_10 = arith.constant 0 : index
    %9 = vector.load %arg2[%c1, %c0_9, %c0_10] : memref<2x5x256xbf16, #tpu.memory_space<vmem>>, vector<1x5x256xbf16>
    %10 = vector.shape_cast %9 : vector<1x5x256xbf16> to vector<5x256xbf16>
    %cst_11 = arith.constant dense<0.000000e+00> : vector<5x128xf32>
    %11 = tpu.matmul %10, %0, %cst_11 {dimension_numbers = #tpu.dot_dimension_numbers<[1], [1], [0], [0], [0, 0, 1, 0], [], []>} : vector<5x256xbf16>, vector<128x256xbf16>, vector<5x128xf32> -> vector<5x128xf32>
    %12 = arith.addf %11, %1 : vector<5x128xf32>
    %c1_12 = arith.constant 1 : index
    %c0_13 = arith.constant 0 : index
    %c0_14 = arith.constant 0 : index
    %13 = vector.load %arg5[%c1_12, %c0_13, %c0_14] : memref<2x5x128xf32, #tpu.memory_space<vmem>>, vector<1x5x128xf32>
    %14 = vector.shape_cast %13 : vector<1x5x128xf32> to vector<5x128xf32>
    %15 = vector.shape_cast %12 : vector<5x128xf32> to vector<1x5x128xf32>
    tpu.vector_store %arg5[%c1_12, %c0_13, %c0_14], %15 {strides = array<i32>} : memref<2x5x128xf32, #tpu.memory_space<vmem>>, vector<1x5x128xf32>,
    return
  }
  func.func @transform_0(%arg0: i32, %arg1: i32) -> (i32, i32, i32) {
    %c0_i32 = arith.constant 0 : i32
    %c0_i32_0 = arith.constant 0 : i32
    return %arg1, %arg0, %c0_i32 : i32, i32, i32
  }
  func.func @transform_1(%arg0: i32, %arg1: i32) -> (i32, i32) {
    %c0_i32 = arith.constant 0 : i32
    %c0_i32_0 = arith.constant 0 : i32
    %c0_i32_1 = arith.constant 0 : i32
    return %c0_i32, %c0_i32_0 : i32, i32
  }
  func.func @transform_2(%arg0: i32, %arg1: i32) -> (i32, i32) {
    %c0_i32 = arith.constant 0 : i32
    %c0_i32_0 = arith.constant 0 : i32
    return %arg0, %c0_i32 : i32, i32
  }
  func.func @transform_3(%arg0: i32, %arg1: i32) -> (i32, i32, i32) {
    %c0_i32 = arith.constant 0 : i32
    %c0_i32_0 = arith.constant 0 : i32
    return %arg1, %arg0, %c0_i32 : i32, i32, i32
  }
}

</mosaic_0001>

<llo_original>
// kernel: vit_embeddings.1
$region0: #{vit_embeddings.1}
  #allocation0 [shape = 'u32[]', space=smem, size = 0x4, offset = 0x4, fixed_abs, tag = 'smem constant byte address 0x4 - core index']
  #allocation1 [shape = 'u32[72,128]{1,0:T(1,128)}', space=vmem, size = 0x9000, scoped, tag = 'internal scratch']
  %s0 = inlined_call_operand.vmem [shape: bf16[2,5,256], index: 0, kind: input, shape index: {}]
  %s1 = inlined_call_operand.vmem [shape: bf16[128,256], index: 1, kind: input, shape index: {}]
  %s2 = inlined_call_operand.vmem [shape: f32[5,128], index: 2, kind: input, shape index: {}]
  %s3 = inlined_call_operand.vmem [shape: f32[2,5,128], index: 3, kind: output, shape index: {}]
  %s4 = sld [smem:[#allocation0]]
  $region22: #{vit_embeddings.1} parent=0
    _
  %s6 = ssub.s32 1, %s4
  %s7 = scalar_select 0, %s6, %s4
  // Predicated region
  $region2: #{vit_embeddings.1} parent=0 // pred_check
    _
  $region3: #{vit_embeddings.1} parent=0 // pred_check_branch
    %9 = sbr.rel (0) target = $region5
  $region4: #{vit_embeddings.1} parent=0 // pred_region
    _
  $region5: #{vit_embeddings.1} parent=0 // pred_fallthru
    _
  // Predicated region
  $region6: #{vit_embeddings.1} parent=0 // pred_check
    _
  $region7: #{vit_embeddings.1} parent=0 // pred_check_branch
    %11 = sbr.rel (0) target = $region9
  $region8: #{vit_embeddings.1} parent=0 // pred_region
    _
  $region9: #{vit_embeddings.1} parent=0 // pred_fallthru
    _
  // Predicated region
  $region10: #{vit_embeddings.1} parent=0 // pred_check
    _
  $region11: #{vit_embeddings.1} parent=0 // pred_check_branch
    %13 = sbr.rel (0) target = $region13
  $region12: #{vit_embeddings.1} parent=0 // pred_region
    _
  $region13: #{vit_embeddings.1} parent=0 // pred_fallthru
    _
  %v14 = vld [vmem:[%s1] sm:$0xff]
  %v15 = vld [vmem:[%s1 + $0x8] sm:$0xff]
  %v16 = vld [vmem:[%s1 + $0x10] sm:$0xff]
  %v17 = vld [vmem:[%s1 + $0x18] sm:$0xff]
  %v18 = vld [vmem:[%s1 + $0x20] sm:$0xff]
  %v19 = vld [vmem:[%s1 + $0x28] sm:$0xff]
  %v20 = vld [vmem:[%s1 + $0x30] sm:$0xff]
  %v21 = vld [vmem:[%s1 + $0x38] sm:$0xff]
  %v22 = vld [vmem:[%s1 + $0x40] sm:$0xff]
  %v23 = vld [vmem:[%s1 + $0x48] sm:$0xff]
  %v24 = vld [vmem:[%s1 + $0x50] sm:$0xff]
  %v25 = vld [vmem:[%s1 + $0x58] sm:$0xff]
  %v26 = vld [vmem:[%s1 + $0x60] sm:$0xff]
  %v27 = vld [vmem:[%s1 + $0x68] sm:$0xff]
  %v28 = vld [vmem:[%s1 + $0x70] sm:$0xff]
  %v29 = vld [vmem:[%s1 + $0x78] sm:$0xff]
  %v30 = vld [vmem:[%s2] sm:$0x1f]
  %v31 = vld [vmem:[%s0] sm:$0x77]
  %v33 = vunpack.c.l.b16 %v31
  %v34 = vunpack.c.h.b16 %v31
  %v35 = vpack.c.b16 %v33, %v33
  %v36 = vpack.c.b16 %v34, %v34
  %v55 = vunpack.c.l.b16 %v14
  %v56 = vunpack.c.h.b16 %v14
  %v57 = vunpack.c.l.b16 %v15
  %v58 = vunpack.c.h.b16 %v15
  %v59 = vunpack.c.l.b16 %v16
  %v60 = vunpack.c.h.b16 %v16
  %v61 = vunpack.c.l.b16 %v17
  %v62 = vunpack.c.h.b16 %v17
  %v63 = vunpack.c.l.b16 %v18
  %v64 = vunpack.c.h.b16 %v18
  %v65 = vunpack.c.l.b16 %v19
  %v66 = vunpack.c.h.b16 %v19
  %v67 = vunpack.c.l.b16 %v20
  %v68 = vunpack.c.h.b16 %v20
  %v69 = vunpack.c.l.b16 %v21
  %v70 = vunpack.c.h.b16 %v21
  %v71 = vunpack.c.l.b16 %v22
  %v72 = vunpack.c.h.b16 %v22
  %v73 = vunpack.c.l.b16 %v23
  %v74 = vunpack.c.h.b16 %v23
  %v75 = vunpack.c.l.b16 %v24
  %v76 = vunpack.c.h.b16 %v24
  %v77 = vunpack.c.l.b16 %v25
  %v78 = vunpack.c.h.b16 %v25
  %v79 = vunpack.c.l.b16 %v26
  %v80 = vunpack.c.h.b16 %v26
  %v81 = vunpack.c.l.b16 %v27
  %v82 = vunpack.c.h.b16 %v27
  %v83 = vunpack.c.l.b16 %v28
  %v84 = vunpack.c.h.b16 %v28
  %v85 = vunpack.c.l.b16 %v29
  %v86 = vunpack.c.h.b16 %v29
  %v87 = vpack.c.b16 %v57, %v55
  %v88 = vpack.c.b16 %v58, %v56
  %v89 = vpack.c.b16 %v61, %v59
  %v90 = vpack.c.b16 %v62, %v60
  %v91 = vpack.c.b16 %v65, %v63
  %v92 = vpack.c.b16 %v66, %v64
  %v93 = vpack.c.b16 %v69, %v67
  %v94 = vpack.c.b16 %v70, %v68
  %v95 = vpack.c.b16 %v73, %v71
  %v96 = vpack.c.b16 %v74, %v72
  %v97 = vpack.c.b16 %v77, %v75
  %v98 = vpack.c.b16 %v78, %v76
  %v99 = vpack.c.b16 %v81, %v79
  %v100 = vpack.c.b16 %v82, %v80
  %v101 = vpack.c.b16 %v85, %v83
  %v102 = vpack.c.b16 %v86, %v84
  %119 = vmatpush.bf16.xpose.msra.mxu0 %v101
  %120 = vmatpush.bf16.xpose.msra.mxu0 %v99
  %121 = vmatpush.bf16.xpose.msra.mxu0 %v97
  %122 = vmatpush.bf16.xpose.msra.mxu0 %v95
  %123 = vmatpush.bf16.xpose.msra.mxu0 %v93
  %124 = vmatpush.bf16.xpose.msra.mxu0 %v91
  %125 = vmatpush.bf16.xpose.msra.mxu0 %v89
  %126 = vmatpush.bf16.xpose.msra.mxu0 %v87
  %127 = vmatmul.bf16.gmra.mxu0 %v35
  %v128 = vpop.f32.mrf.mxu0
  %v129 = vadd.f32 %v30, %v128
  %v130 = vpop.f32.mrf.mxu0
  %131 = vdwg.mxu0
  %132 = vmatpush.bf16.xpose.msra.mxu0 %v102
  %133 = vmatpush.bf16.xpose.msra.mxu0 %v100
  %134 = vmatpush.bf16.xpose.msra.mxu0 %v98
  %135 = vmatpush.bf16.xpose.msra.mxu0 %v96
  %136 = vmatpush.bf16.xpose.msra.mxu0 %v94
  %137 = vmatpush.bf16.xpose.msra.mxu0 %v92
  %138 = vmatpush.bf16.xpose.msra.mxu0 %v90
  %139 = vmatpush.bf16.xpose.msra.mxu0 %v88
  %140 = vmatmul.bf16.gmra.mxu0 %v36
  %v141 = vpop.f32.mrf.mxu0
  %v142 = vadd.f32 %v129, %v141
  %v143 = vpop.f32.mrf.mxu0
  %144 = vdwg.mxu0
  %145 = vst [vmem:[%s3] sm:$0x1f] %v142
  %s146 = scalar_lea.vmem %s0, 8
  %v147 = vld [vmem:[%s146] sm:$0x77]
  %v149 = vunpack.c.l.b16 %v147
  %v150 = vunpack.c.h.b16 %v147
  %v151 = vpack.c.b16 %v149, %v149
  %v152 = vpack.c.b16 %v150, %v150
  %155 = vmatpush.bf16.xpose.msra.mxu0 %v101
  %156 = vmatpush.bf16.xpose.msra.mxu0 %v99
  %157 = vmatpush.bf16.xpose.msra.mxu0 %v97
  %158 = vmatpush.bf16.xpose.msra.mxu0 %v95
  %159 = vmatpush.bf16.xpose.msra.mxu0 %v93
  %160 = vmatpush.bf16.xpose.msra.mxu0 %v91
  %161 = vmatpush.bf16.xpose.msra.mxu0 %v89
  %162 = vmatpush.bf16.xpose.msra.mxu0 %v87
  %163 = vmatmul.bf16.gmra.mxu0 %v151
  %v164 = vpop.f32.mrf.mxu0
  %v165 = vadd.f32 %v30, %v164
  %v166 = vpop.f32.mrf.mxu0
  %167 = vdwg.mxu0
  %168 = vmatpush.bf16.xpose.msra.mxu0 %v102
  %169 = vmatpush.bf16.xpose.msra.mxu0 %v100
  %170 = vmatpush.bf16.xpose.msra.mxu0 %v98
  %171 = vmatpush.bf16.xpose.msra.mxu0 %v96
  %172 = vmatpush.bf16.xpose.msra.mxu0 %v94
  %173 = vmatpush.bf16.xpose.msra.mxu0 %v92
  %174 = vmatpush.bf16.xpose.msra.mxu0 %v90
  %175 = vmatpush.bf16.xpose.msra.mxu0 %v88
  %176 = vmatmul.bf16.gmra.mxu0 %v152
  %v177 = vpop.f32.mrf.mxu0
  %v178 = vadd.f32 %v165, %v177
  %v179 = vpop.f32.mrf.mxu0
  %180 = vdwg.mxu0
  %s181 = scalar_lea.vmem %s3, 8
  %182 = vst [vmem:[%s181] sm:$0x1f] %v178
  // Predicated region
  $region14: #{vit_embeddings.1} parent=0 // pred_check
    _
  $region15: #{vit_embeddings.1} parent=0 // pred_check_branch
    %184 = sbr.rel (0) target = $region17
  $region16: #{vit_embeddings.1} parent=0 // pred_region
    _
  $region17: #{vit_embeddings.1} parent=0 // pred_fallthru
    _
  // Predicated region
  $region18: #{vit_embeddings.1} parent=0 // pred_check
    _
  $region19: #{vit_embeddings.1} parent=0 // pred_check_branch
    %186 = sbr.rel (0) target = $region21
  $region20: #{vit_embeddings.1} parent=0 // pred_region
    _
  $region21: #{vit_embeddings.1} parent=0 // pred_fallthru
    _

</llo_original>
